<compile_context>
chip_gen: v6e
topology: v6e:2x2x1
jax: 0.10.0
libtpu: 0.0.40
codegen_flags: <defaults>
</compile_context>

<pallas_src>
import functools

import jax
import jax.numpy as jnp
from jax.experimental import pallas as pl
from jax.experimental.pallas import tpu as pltpu


def _discriminator_kernel(x_ref, w1_ref, b1_ref, w2_ref, b2_ref, o_ref):
    # Layer 1: (tm, K) @ (K, H) on the MXU, f32 accumulation.
    h = jnp.dot(x_ref[...], w1_ref[...], preferred_element_type=jnp.float32)
    h = jnp.maximum(h + b1_ref[...], 0.0)                    # bias + ReLU (VPU), f32
    # Layer 2: (tm, H) @ (H, 1) also on the MXU (huge slack there); keeps the
    # cross-lane reduce off the XLU and writes a plain (tm, 1) block.
    z = jnp.dot(h, w2_ref[...], preferred_element_type=jnp.float32) + b2_ref[0]
    o_ref[...] = jax.nn.sigmoid(z).astype(o_ref.dtype)       # (tm, 1) store


def _xla_forward(x, w1, b1, w2, b2):
    h = jnp.maximum(jnp.dot(x, w1) + b1, 0.0)
    return jax.nn.sigmoid(jnp.dot(h, w2) + b2)


def _pick_tm(batch, tm_cap):
    """Batch tile: multiple of 128, as large as possible, but >= 2 grid steps."""
    tm_cap = max(128, (int(tm_cap) // 128) * 128)
    half = (((batch + 1) // 2) // 128) * 128      # ~B/2 rounded down to 128
    if half <= 0:
        half = 128
    return max(128, min(tm_cap, half))


def discriminator_forward(x, w1, b1, w2, b2, *, tm=4096, min_pallas_batch=128):
    """Forward pass of the Discriminator.

    x : (B, input_dim) float32 or bfloat16
    w1: (input_dim, H), b1: (1, H), w2: (H, 1), b2: (1, 1)   (W transposed vs torch)
    Returns (B, 1) float32 in [0, 1].

    For best HBM efficiency on v5e/v6e/v7x feed x (and w1) already in bfloat16
    from the producer; the kernel keeps MXU accumulation and the sigmoid in f32.
    """
    B, K = x.shape
    K_w, H = w1.shape
    assert K == K_w and w2.shape == (H, 1)

    # Tiny batches: launch/DMA-setup overhead dominates -> fused XLA path.
    if B < min_pallas_batch:
        return _xla_forward(x, w1, b1, w2, b2)

    tm = _pick_tm(B, tm)
    grid_m = pl.cdiv(B, tm)   # ragged last block: OOB rows loaded as garbage,
                              # their output stores are masked away by Pallas.

    b1_row = b1.reshape(1, H).astype(jnp.float32)
    w2_col = w2.reshape(H, 1).astype(jnp.float32)
    b2_s = b2.reshape(1).astype(jnp.float32)       # scalar, lives in SMEM

    xb = jnp.dtype(x.dtype).itemsize
    w1b = jnp.dtype(w1.dtype).itemsize
    cost = pl.CostEstimate(
        flops=2 * B * H * (K + 1),
        transcendentals=B,
        bytes_accessed=(B * K * xb + K * H * w1b + 2 * H * 4 + 4 + B * 4),
    )

    out = pl.pallas_call(
        _discriminator_kernel,
        out_shape=jax.ShapeDtypeStruct((B, 1), jnp.float32),
        grid_spec=pltpu.PrefetchScalarGridSpec(
            num_scalar_prefetch=0,
            grid=(grid_m,),
            in_specs=[
                pl.BlockSpec((tm, K), lambda i: (i, 0)),             # x batch tile
                pl.BlockSpec((K, H), lambda i: (0, 0)),              # W1 (resident)
                pl.BlockSpec((1, H), lambda i: (0, 0)),              # b1 row
                pl.BlockSpec((H, 1), lambda i: (0, 0)),              # w2 column
                pl.BlockSpec(memory_space=pltpu.MemorySpace.SMEM),   # b2 scalar
            ],
            out_specs=pl.BlockSpec((tm, 1), lambda i: (i, 0)),
        ),
        compiler_params=pltpu.CompilerParams(
            dimension_semantics=("parallel",)),
        cost_estimate=cost,
    )(x, w1, b1_row, w2_col, b2_s)

    return out


def init_discriminator_params(key, input_dim, hidden=128):
    """PyTorch nn.Linear default init: uniform(-1/sqrt(fan_in), 1/sqrt(fan_in))."""
    k1, k2, k3, k4 = jax.random.split(key, 4)
    bound1 = 1.0 / jnp.sqrt(jnp.float32(input_dim))
    bound2 = 1.0 / jnp.sqrt(jnp.float32(hidden))
    w1 = jax.random.uniform(k1, (input_dim, hidden), jnp.float32, -bound1, bound1)
    b1 = jax.random.uniform(k2, (1, hidden), jnp.float32, -bound1, bound1)
    w2 = jax.random.uniform(k3, (hidden, 1), jnp.float32, -bound2, bound2)
    b2 = jax.random.uniform(k4, (1, 1), jnp.float32, -bound2, bound2)
    return w1, b1, w2, b2


if __name__ == "__main__":
    input_dim = 100

    key = jax.random.PRNGKey(0)
    kx, kp = jax.random.split(key)
    w1, b1, w2, b2 = init_discriminator_params(kp, input_dim)

    # 1) Aligned batch (multi-step grid: tm=256 -> 2 steps).
    batch = 512
    x = jax.random.normal(kx, (batch, input_dim), jnp.float32)
    fwd = jax.jit(discriminator_forward)
    out = jax.block_until_ready(fwd(x, w1, b1, w2, b2))
    ref = _xla_forward(x, w1, b1, w2, b2)
    assert out.shape == (batch, 1)
    assert bool(jnp.all(jnp.isfinite(out)))
    assert jnp.allclose(out, ref, atol=1e-4, rtol=1e-4), \
        float(jnp.max(jnp.abs(out - ref)))

    # 2) Ragged batch (not a multiple of 128): exercises the masked last block.
    batch_r = 300
    x_r = x[:batch_r]
    out_r = jax.block_until_ready(fwd(x_r, w1, b1, w2, b2))
    assert out_r.shape == (batch_r, 1)
    assert bool(jnp.all(jnp.isfinite(out_r)))
    assert jnp.allclose(out_r, ref[:batch_r], atol=1e-4, rtol=1e-4)

    # 3) bf16 x/W1 fed straight from the "producer" (no wrapper cast); looser tol.
    out_bf = jax.block_until_ready(
        fwd(x.astype(jnp.bfloat16), w1.astype(jnp.bfloat16), b1, w2, b2))
    assert jnp.allclose(out_bf, ref, atol=2e-2, rtol=2e-2)

    # 4) Small-batch path (dispatches to plain XLA below the threshold).
    out_small = discriminator_forward(x[:8], w1, b1, w2, b2)
    assert out_small.shape == (8, 1)
    assert jnp.allclose(out_small, ref[:8], atol=1e-4, rtol=1e-4)

    print("KERNEL_OK")
</pallas_src>

<mosaic_0001>
module attributes {stable_mosaic.version = 11 : i64} {
  func.func @_discriminator_kernel(%arg0: i32, %arg1: memref<256x100xf32, #tpu.memory_space<vmem>>, %arg2: memref<100x128xf32, #tpu.memory_space<vmem>>, %arg3: memref<1x128xf32, #tpu.memory_space<vmem>>, %arg4: memref<128x1xf32, #tpu.memory_space<vmem>>, %arg5: memref<1xf32, #tpu.memory_space<smem>>, %arg6: memref<256x1xf32, #tpu.memory_space<vmem>>) attributes {dimension_semantics = [#tpu.dimension_semantics<parallel>], iteration_bounds = array<i64: 2>, scalar_prefetch = 0 : i64, scratch_operands = 0 : i64, tpu.core_type = #tpu.core_type<tc>, window_params = [{transform_indices = @transform_0, window_bounds = array<i64: 256, 100>}, {pipeline_mode = #tpu.pipeline_mode<synchronous>, transform_indices = @transform_1, window_bounds = array<i64: 100, 128>}, {pipeline_mode = #tpu.pipeline_mode<synchronous>, transform_indices = @transform_2, window_bounds = array<i64: 1, 128>}, {pipeline_mode = #tpu.pipeline_mode<synchronous>, transform_indices = @transform_3, window_bounds = array<i64: 128, 1>}, {transform_indices = @transform_4, window_bounds = array<i64: 1>}, {transform_indices = @transform_5, window_bounds = array<i64: 256, 1>}]} {
    %c0 = arith.constant 0 : index
    %c0_0 = arith.constant 0 : index
    %0 = vector.load %arg1[%c0, %c0_0] : memref<256x100xf32, #tpu.memory_space<vmem>>, vector<256x100xf32>
    %c0_1 = arith.constant 0 : index
    %c0_2 = arith.constant 0 : index
    %1 = vector.load %arg2[%c0_1, %c0_2] : memref<100x128xf32, #tpu.memory_space<vmem>>, vector<100x128xf32>
    %cst = arith.constant dense<0.000000e+00> : vector<256x128xf32>
    %2 = tpu.matmul %0, %1, %cst {dimension_numbers = #tpu.dot_dimension_numbers<[1], [0], [0], [1], [0, 0, 1, 1], [], []>} : vector<256x100xf32>, vector<100x128xf32>, vector<256x128xf32> -> vector<256x128xf32>
    %c0_3 = arith.constant 0 : index
    %c0_4 = arith.constant 0 : index
    %3 = vector.load %arg3[%c0_3, %c0_4] : memref<1x128xf32, #tpu.memory_space<vmem>>, vector<1x128xf32>
    %4 = vector.broadcast %3 : vector<1x128xf32> to vector<256x128xf32>
    %5 = arith.addf %2, %4 : vector<256x128xf32>
    %cst_5 = arith.constant 0.000000e+00 : f32
    %6 = vector.broadcast %cst_5 : f32 to vector<256x128xf32>
    %7 = arith.maximumf %5, %6 : vector<256x128xf32>
    %c0_6 = arith.constant 0 : index
    %c0_7 = arith.constant 0 : index
    %8 = vector.load %arg4[%c0_6, %c0_7] : memref<128x1xf32, #tpu.memory_space<vmem>>, vector<128x1xf32>
    %cst_8 = arith.constant dense<0.000000e+00> : vector<256x1xf32>
    %9 = tpu.matmul %7, %8, %cst_8 {dimension_numbers = #tpu.dot_dimension_numbers<[1], [0], [0], [1], [0, 0, 1, 1], [], []>} : vector<256x128xf32>, vector<128x1xf32>, vector<256x1xf32> -> vector<256x1xf32>
    %c0_9 = arith.constant 0 : index
    %10 = memref.load %arg5[%c0_9] : memref<1xf32, #tpu.memory_space<smem>>
    %11 = vector.broadcast %10 : f32 to vector<256x1xf32>
    %12 = arith.addf %9, %11 : vector<256x1xf32>
    %13 = arith.negf %12 : vector<256x1xf32>
    %14 = math.exp %13 : vector<256x1xf32>
    %cst_10 = arith.constant 1.000000e+00 : f32
    %15 = vector.broadcast %cst_10 : f32 to vector<256x1xf32>
    %16 = arith.addf %15, %14 : vector<256x1xf32>
    %17 = arith.divf %15, %16 : vector<256x1xf32>
    %c0_11 = arith.constant 0 : index
    %c0_12 = arith.constant 0 : index
    %18 = vector.load %arg6[%c0_11, %c0_12] : memref<256x1xf32, #tpu.memory_space<vmem>>, vector<256x1xf32>
    tpu.vector_store %arg6[%c0_11, %c0_12], %17 {strides = array<i32>} : memref<256x1xf32, #tpu.memory_space<vmem>>, vector<256x1xf32>,
    return
  }
  func.func @transform_0(%arg0: i32) -> (i32, i32) {
    %c0_i32 = arith.constant 0 : i32
    %c0_i32_0 = arith.constant 0 : i32
    return %arg0, %c0_i32 : i32, i32
  }
  func.func @transform_1(%arg0: i32) -> (i32, i32) {
    %c0_i32 = arith.constant 0 : i32
    %c0_i32_0 = arith.constant 0 : i32
    %c0_i32_1 = arith.constant 0 : i32
    return %c0_i32, %c0_i32_0 : i32, i32
  }
  func.func @transform_2(%arg0: i32) -> (i32, i32) {
    %c0_i32 = arith.constant 0 : i32
    %c0_i32_0 = arith.constant 0 : i32
    %c0_i32_1 = arith.constant 0 : i32
    return %c0_i32, %c0_i32_0 : i32, i32
  }
  func.func @transform_3(%arg0: i32) -> (i32, i32) {
    %c0_i32 = arith.constant 0 : i32
    %c0_i32_0 = arith.constant 0 : i32
    %c0_i32_1 = arith.constant 0 : i32
    return %c0_i32, %c0_i32_0 : i32, i32
  }
  func.func @transform_4(%arg0: i32) -> i32 {
    %c0_i32 = arith.constant 0 : i32
    %c0_i32_0 = arith.constant 0 : i32
    return %c0_i32 : i32
  }
  func.func @transform_5(%arg0: i32) -> (i32, i32) {
    %c0_i32 = arith.constant 0 : i32
    %c0_i32_0 = arith.constant 0 : i32
    return %arg0, %c0_i32 : i32, i32
  }
}

</mosaic_0001>

<llo_original>
// kernel: discriminator_forward.1
$region0: #{discriminator_forward.1}
  #allocation0 [shape = 'u32[]', space=smem, size = 0x4, offset = 0x4, fixed_abs, tag = 'smem constant byte address 0x4 - core index']
  #allocation1 [shape = 'u32[144,128]{1,0:T(1,128)}', space=vmem, size = 0x12000, scoped, tag = 'internal scratch']
  #allocation2 [shape = 'f32[1]{0:T(128)S(6)}', space=smem, size = 0x200, scoped, tag = 'scoped memory for discriminator_forward.1']
  %s0 = inlined_call_operand.vmem [shape: f32[512,100], index: 0, kind: input, shape index: {}]
  %s1 = inlined_call_operand.vmem [shape: f32[100,128], index: 1, kind: input, shape index: {}]
  %s2 = inlined_call_operand.vmem [shape: f32[1,128], index: 2, kind: input, shape index: {}]
  %s3 = inlined_call_operand.vmem [shape: f32[128,1], index: 3, kind: input, shape index: {}]
  %s4 = inlined_call_operand.<no memory space> [shape: f32[1], index: 4, kind: input, shape index: {}]
  %s5 = inlined_call_operand.vmem [shape: f32[512,1], index: 5, kind: output, shape index: {}]
  %s6 = sld [smem:[#allocation0]]
  $region53: #{discriminator_forward.1} parent=0
    _
  %s8 = ssub.s32 1, %s6
  %s9 = scalar_select 0, %s8, %s6
  %10 = sst [smem:[#allocation2]] %s4
  loop: start=0, step=1, limit=4
  $region2: #{discriminator_forward.1} parent=0 // loop_pre_header
    _
  $region3: #{discriminator_forward.1} parent=0 // loop_header
    %s12 = sphi 0, %s16
    %p13 = scmp.ge.s32.totalorder %s12, 4
    %s22 = sphi 0, %s24
    %s25 = sphi 0, %s22
    %s26 = sphi 0, %s25
    %s42 = sphi 0, %s26
    %s46 = sphi 0, %s46
    %s48 = sphi 0, %s46
    %s49 = sphi 0, %s48
    %s63 = sphi 0, %s49
    %s67 = sphi 0, %s67
    %s69 = sphi 0, %s67
    %s70 = sphi 0, %s69
    %s84 = sphi 0, %s70
    %s88 = sphi 0, %s88
    %s90 = sphi 0, %s88
    %s91 = sphi 0, %s90
    %s105 = sphi 0, %s91
    %s109 = sphi 0, %s109
    %s111 = sphi 0, %s109
    %s112 = sphi 0, %s111
    %s126 = sphi 0, %s112
    %s132 = sphi 0, %s134
    %s135 = sphi 0, %s132
    %s136 = sphi 0, %s135
    %s152 = sphi 0, %s136
  $region4: #{discriminator_forward.1} parent=0 // loop_header_branch
    %15 = sbr.rel (%p13) target = $region8
  $region5: #{discriminator_forward.1} parent=0 // loop_body
    %s17 = ssub.s32 %s12, 1
    %s18 = ssub.s32 %s12, 2
    %s19 = sadd.s32 %s12, 1
    %s20 = ssub.s32 %s12, %s19
    %p21 = scmp.eq.s32.totalorder %s20, 0
    %s23 = sadd.s32 %s22, 1
    %s24 = scalar_select %p21, %s22, %s23
    %p27 = pneg %p21
    %p28 = scmp.eq.s32.totalorder %s12, 1
    %p29 = por %p27, %p28
    %p30 = scmp.ne.s32.totalorder %s22, %s25
    %p31 = scmp.eq.s32.totalorder %s12, 0
    %p32 = por %p30, %p31
    %p33 = scmp.ne.s32.totalorder %s22, %s25
    %p34 = scmp.eq.s32.totalorder %s17, 1
    %p35 = por %p33, %p34
    %p36 = scmp.ne.s32.totalorder %s25, %s26
    %p37 = scmp.eq.s32.totalorder %s17, 0
    %p38 = por %p36, %p37
    %p39 = scmp.ne.s32.totalorder %s25, %s26
    %p40 = scmp.eq.s32.totalorder %s18, 1
    %p41 = por %p39, %p40
    %p43 = scmp.ne.s32.totalorder %s26, %s42
    %p44 = scmp.eq.s32.totalorder %s18, 0
    %p45 = por %p43, %p44
    %s47 = sadd.s32 %s46, 1
    %p50 = scmp.eq.s32.totalorder %s12, 1
    %p51 = scmp.ne.s32.totalorder %s46, %s48
    %p52 = scmp.eq.s32.totalorder %s12, 0
    %p53 = por %p51, %p52
    %p54 = scmp.ne.s32.totalorder %s46, %s48
    %p55 = scmp.eq.s32.totalorder %s17, 1
    %p56 = por %p54, %p55
    %p57 = scmp.ne.s32.totalorder %s48, %s49
    %p58 = scmp.eq.s32.totalorder %s17, 0
    %p59 = por %p57, %p58
    %p60 = scmp.ne.s32.totalorder %s48, %s49
    %p61 = scmp.eq.s32.totalorder %s18, 1
    %p62 = por %p60, %p61
    %p64 = scmp.ne.s32.totalorder %s49, %s63
    %p65 = scmp.eq.s32.totalorder %s18, 0
    %p66 = por %p64, %p65
    %s68 = sadd.s32 %s67, 1
    %p71 = scmp.eq.s32.totalorder %s12, 1
    %p72 = scmp.ne.s32.totalorder %s67, %s69
    %p73 = scmp.eq.s32.totalorder %s12, 0
    %p74 = por %p72, %p73
    %p75 = scmp.ne.s32.totalorder %s67, %s69
    %p76 = scmp.eq.s32.totalorder %s17, 1
    %p77 = por %p75, %p76
    %p78 = scmp.ne.s32.totalorder %s69, %s70
    %p79 = scmp.eq.s32.totalorder %s17, 0
    %p80 = por %p78, %p79
    %p81 = scmp.ne.s32.totalorder %s69, %s70
    %p82 = scmp.eq.s32.totalorder %s18, 1
    %p83 = por %p81, %p82
    %p85 = scmp.ne.s32.totalorder %s70, %s84
    %p86 = scmp.eq.s32.totalorder %s18, 0
    %p87 = por %p85, %p86
    %s89 = sadd.s32 %s88, 1
    %p92 = scmp.eq.s32.totalorder %s12, 1
    %p93 = scmp.ne.s32.totalorder %s88, %s90
    %p94 = scmp.eq.s32.totalorder %s12, 0
    %p95 = por %p93, %p94
    %p96 = scmp.ne.s32.totalorder %s88, %s90
    %p97 = scmp.eq.s32.totalorder %s17, 1
    %p98 = por %p96, %p97
    %p99 = scmp.ne.s32.totalorder %s90, %s91
    %p100 = scmp.eq.s32.totalorder %s17, 0
    %p101 = por %p99, %p100
    %p102 = scmp.ne.s32.totalorder %s90, %s91
    %p103 = scmp.eq.s32.totalorder %s18, 1
    %p104 = por %p102, %p103
    %p106 = scmp.ne.s32.totalorder %s91, %s105
    %p107 = scmp.eq.s32.totalorder %s18, 0
    %p108 = por %p106, %p107
    %s110 = sadd.s32 %s109, 1
    %p113 = scmp.eq.s32.totalorder %s12, 1
    %p114 = scmp.ne.s32.totalorder %s109, %s111
    %p115 = scmp.eq.s32.totalorder %s12, 0
    %p116 = por %p114, %p115
    %p117 = scmp.ne.s32.totalorder %s109, %s111
    %p118 = scmp.eq.s32.totalorder %s17, 1
    %p119 = por %p117, %p118
    %p120 = scmp.ne.s32.totalorder %s111, %s112
    %p121 = scmp.eq.s32.totalorder %s17, 0
    %p122 = por %p120, %p121
    %p123 = scmp.ne.s32.totalorder %s111, %s112
    %p124 = scmp.eq.s32.totalorder %s18, 1
    %p125 = por %p123, %p124
    %p127 = scmp.ne.s32.totalorder %s112, %s126
    %p128 = scmp.eq.s32.totalorder %s18, 0
    %p129 = por %p127, %p128
    %s130 = ssub.s32 %s12, %s19
    %p131 = scmp.eq.s32.totalorder %s130, 0
    %s133 = sadd.s32 %s132, 1
    %s134 = scalar_select %p131, %s132, %s133
    %p137 = pneg %p131
    %p138 = scmp.eq.s32.totalorder %s12, 1
    %p139 = por %p137, %p138
    %p140 = scmp.ne.s32.totalorder %s132, %s135
    %p141 = scmp.eq.s32.totalorder %s12, 0
    %p142 = por %p140, %p141
    %p143 = scmp.ne.s32.totalorder %s132, %s135
    %p144 = scmp.eq.s32.totalorder %s17, 1
    %p145 = por %p143, %p144
    %p146 = scmp.ne.s32.totalorder %s135, %s136
    %p147 = scmp.eq.s32.totalorder %s17, 0
    %p148 = por %p146, %p147
    %p149 = scmp.ne.s32.totalorder %s135, %s136
    %p150 = scmp.eq.s32.totalorder %s18, 1
    %p151 = por %p149, %p150
    %p153 = scmp.ne.s32.totalorder %s136, %s152
    %p154 = scmp.eq.s32.totalorder %s18, 0
    %p155 = por %p153, %p154
    %p156 = scmp.le.s32.totalorder 1, %s12
    %p157 = scmp.lt.s32.totalorder %s12, 3
    %p158 = pnand %p156, %p157
    %p159 = pneg %p158
    // Predicated region
    $region9: #{discriminator_forward.1} parent=5 // pred_check
      _
    $region10: #{discriminator_forward.1} parent=5 // pred_check_branch
      %161 = sbr.rel (%p158) target = $region12
    $region11: #{discriminator_forward.1} parent=5 // pred_region
      %s162 = ssub.s32 %s12, 1
      // Predicated region
      $region13: #{discriminator_forward.1} parent=11 // pred_check
        %p163 = pneg %p59
      $region14: #{discriminator_forward.1} parent=11 // pred_check_branch
        %165 = sbr.rel (%p163) target = $region16
      $region15: #{discriminator_forward.1} parent=11 // pred_region
        _
      $region16: #{discriminator_forward.1} parent=11 // pred_fallthru
        _
      // Predicated region
      $region17: #{discriminator_forward.1} parent=11 // pred_check
        %p166 = pneg %p80
      $region18: #{discriminator_forward.1} parent=11 // pred_check_branch
        %168 = sbr.rel (%p166) target = $region20
      $region19: #{discriminator_forward.1} parent=11 // pred_region
        _
      $region20: #{discriminator_forward.1} parent=11 // pred_fallthru
        _
      // Predicated region
      $region21: #{discriminator_forward.1} parent=11 // pred_check
        %p169 = pneg %p101
      $region22: #{discriminator_forward.1} parent=11 // pred_check_branch
        %171 = sbr.rel (%p169) target = $region24
      $region23: #{discriminator_forward.1} parent=11 // pred_region
        _
      $region24: #{discriminator_forward.1} parent=11 // pred_fallthru
        _
      // Predicated region
      $region25: #{discriminator_forward.1} parent=11 // pred_check
        %p172 = pneg %p122
      $region26: #{discriminator_forward.1} parent=11 // pred_check_branch
        %174 = sbr.rel (%p172) target = $region28
      $region27: #{discriminator_forward.1} parent=11 // pred_region
        _
      $region28: #{discriminator_forward.1} parent=11 // pred_fallthru
        _
    $region12: #{discriminator_forward.1} parent=5 // pred_fallthru
      _
    %p175 = scmp.lt.s32.totalorder %s12, 2
    // Predicated region
    $region29: #{discriminator_forward.1} parent=5 // pred_check
      %p176 = pneg %p175
    $region30: #{discriminator_forward.1} parent=5 // pred_check_branch
      %178 = sbr.rel (%p176) target = $region32
    $region31: #{discriminator_forward.1} parent=5 // pred_region
      // Predicated region
      $region33: #{discriminator_forward.1} parent=31 // pred_check
        %p179 = pneg %p32
      $region34: #{discriminator_forward.1} parent=31 // pred_check_branch
        %181 = sbr.rel (%p179) target = $region36
      $region35: #{discriminator_forward.1} parent=31 // pred_region
        %s182 = smul.u32 32, %s12
        %p183 = scmp.lt.s32.totalorder %s182, 63
        %s184 = scalar_select %p183, %s182, 63
        %s185 = smul.addr %s184, 8
        %s186 = scalar_lea.vmem %s0, %s185
        %s187 = smul.u32 32, %s12
      $region36: #{discriminator_forward.1} parent=31 // pred_fallthru
        _
    $region32: #{discriminator_forward.1} parent=5 // pred_fallthru
      _
    %p188 = scmp.le.s32.totalorder 1, %s12
    %p189 = scmp.lt.s32.totalorder %s12, 3
    %p190 = pnand %p188, %p189
    %p191 = pneg %p190
    // Predicated region
    $region37: #{discriminator_forward.1} parent=5 // pred_check
      _
    $region38: #{discriminator_forward.1} parent=5 // pred_check_branch
      %193 = sbr.rel (%p190) target = $region40
    $region39: #{discriminator_forward.1} parent=5 // pred_region
      %s194 = ssub.s32 %s12, 1
      %s195 = smul.u32 32, %s17
      %p196 = scmp.lt.s32.totalorder %s195, 63
      %s197 = scalar_select %p196, %s195, 63
      %s198 = smul.addr %s197, 8
      %s199 = scalar_lea.vmem %s0, %s198
      %p200 = pneg %p38
      %p201 = pneg %p35
      %p202 = pneg %p59
      %p203 = pneg %p56
      %p204 = pneg %p80
      %p205 = pneg %p77
      %p206 = pneg %p101
      %p207 = pneg %p98
      %p208 = pneg %p122
      %p209 = pneg %p119
      %p210 = pneg %p148
      %p211 = pneg %p145
      %s212 = smul.u32 32, %s17
      %p213 = scmp.lt.s32.totalorder %s212, 63
      %s214 = scalar_select %p213, %s212, 63
      %s215 = smul.addr %s214, 8
      %s216 = scalar_lea.vmem %s5, %s215
      %s217 = smul.u32 32, %s17
      %p218 = scmp.lt.s32.totalorder %s217, 63
      %s219 = scalar_select %p218, %s217, 63
      %s220 = smul.addr %s219, 8
      %s221 = scalar_lea.vmem %s0, %s220
      %s222 = smul.u32 32, %s17
      %s223 = smul.u32 32, %s17
      %p224 = scmp.lt.s32.totalorder %s223, 63
      %s225 = scalar_select %p224, %s223, 63
      %s226 = smul.addr %s225, 8
      %s227 = scalar_lea.vmem %s5, %s226
      %s228 = smul.u32 32, %s17
      %v229 = vld [vmem:[%s221] sm:$0xff]
      %v230 = vld [vmem:[%s221 + $0x8] sm:$0xff]
      %v231 = vld [vmem:[%s221 + $0x10] sm:$0xff]
      %v232 = vld [vmem:[%s221 + $0x18] sm:$0xff]
      %v233 = vld [vmem:[%s221 + $0x20] sm:$0xff]
      %v234 = vld [vmem:[%s221 + $0x28] sm:$0xff]
      %v235 = vld [vmem:[%s221 + $0x30] sm:$0xff]
      %v236 = vld [vmem:[%s221 + $0x38] sm:$0xff]
      %v237 = vld [vmem:[%s221 + $0x40] sm:$0xff]
      %v238 = vld [vmem:[%s221 + $0x48] sm:$0xff]
      %v239 = vld [vmem:[%s221 + $0x50] sm:$0xff]
      %v240 = vld [vmem:[%s221 + $0x58] sm:$0xff]
      %v241 = vld [vmem:[%s221 + $0x60] sm:$0xff]
      %v242 = vld [vmem:[%s221 + $0x68] sm:$0xff]
      %v243 = vld [vmem:[%s221 + $0x70] sm:$0xff]
      %v244 = vld [vmem:[%s221 + $0x78] sm:$0xff]
      %v245 = vld [vmem:[%s221 + $0x80] sm:$0xff]
      %v246 = vld [vmem:[%s221 + $0x88] sm:$0xff]
      %v247 = vld [vmem:[%s221 + $0x90] sm:$0xff]
      %v248 = vld [vmem:[%s221 + $0x98] sm:$0xff]
      %v249 = vld [vmem:[%s221 + $0xa0] sm:$0xff]
      %v250 = vld [vmem:[%s221 + $0xa8] sm:$0xff]
      %v251 = vld [vmem:[%s221 + $0xb0] sm:$0xff]
      %v252 = vld [vmem:[%s221 + $0xb8] sm:$0xff]
      %v253 = vld [vmem:[%s221 + $0xc0] sm:$0xff]
      %v254 = vld [vmem:[%s221 + $0xc8] sm:$0xff]
      %v255 = vld [vmem:[%s221 + $0xd0] sm:$0xff]
      %v256 = vld [vmem:[%s221 + $0xd8] sm:$0xff]
      %v257 = vld [vmem:[%s221 + $0xe0] sm:$0xff]
      %v258 = vld [vmem:[%s221 + $0xe8] sm:$0xff]
      %v259 = vld [vmem:[%s221 + $0xf0] sm:$0xff]
      %v260 = vld [vmem:[%s221 + $0xf8] sm:$0xff]
      %v261 = vld [vmem:[%s1] sm:$0xff]
      %v262 = vld [vmem:[%s1 + $0x8] sm:$0xff]
      %v263 = vld [vmem:[%s1 + $0x10] sm:$0xff]
      %v264 = vld [vmem:[%s1 + $0x18] sm:$0xff]
      %v265 = vld [vmem:[%s1 + $0x20] sm:$0xff]
      %v266 = vld [vmem:[%s1 + $0x28] sm:$0xff]
      %v267 = vld [vmem:[%s1 + $0x30] sm:$0xff]
      %v268 = vld [vmem:[%s1 + $0x38] sm:$0xff]
      %v269 = vld [vmem:[%s1 + $0x40] sm:$0xff]
      %v270 = vld [vmem:[%s1 + $0x48] sm:$0xff]
      %v271 = vld [vmem:[%s1 + $0x50] sm:$0xff]
      %v272 = vld [vmem:[%s1 + $0x58] sm:$0xff]
      %v273 = vld [vmem:[%s1 + $0x60] sm:$0xf]
      %v274 = vld [vmem:[%s2] sm:$0x1]
      %v276 = vlaneseq
      %v277 = vshrl.u32 %v276, 7
      %v278 = vsub.s32 0, %v277
      %v279 = vrot.slane %v274, %v278
      %vm281 = vcmask 818176
      %v283 = vsel %vm281, %v229, 0
      %v286 = vsel %vm281, %v230, 0
      %v289 = vsel %vm281, %v231, 0
      %v292 = vsel %vm281, %v232, 0
      %v295 = vsel %vm281, %v233, 0
      %v298 = vsel %vm281, %v234, 0
      %v301 = vsel %vm281, %v235, 0
      %v304 = vsel %vm281, %v236, 0
      %v307 = vsel %vm281, %v237, 0
      %v310 = vsel %vm281, %v238, 0
      %v313 = vsel %vm281, %v239, 0
      %v316 = vsel %vm281, %v240, 0
      %v319 = vsel %vm281, %v241, 0
      %v322 = vsel %vm281, %v242, 0
      %v325 = vsel %vm281, %v243, 0
      %v328 = vsel %vm281, %v244, 0
      %v331 = vsel %vm281, %v245, 0
      %v334 = vsel %vm281, %v246, 0
      %v337 = vsel %vm281, %v247, 0
      %v340 = vsel %vm281, %v248, 0
      %v343 = vsel %vm281, %v249, 0
      %v346 = vsel %vm281, %v250, 0
      %v349 = vsel %vm281, %v251, 0
      %v352 = vsel %vm281, %v252, 0
      %v355 = vsel %vm281, %v253, 0
      %v358 = vsel %vm281, %v254, 0
      %v361 = vsel %vm281, %v255, 0
      %v364 = vsel %vm281, %v256, 0
      %v367 = vsel %vm281, %v257, 0
      %v370 = vsel %vm281, %v258, 0
      %v373 = vsel %vm281, %v259, 0
      %v376 = vsel %vm281, %v260, 0
      %vm378 = vcmask 1043456
      %v380 = vsel %vm378, %v273, 0
      %382 = vmatprep.subr.mxu0 0.0
      %383 = vmatpush1.msra.mxu0 0.0
      %384 = vmatprep.subr.mxu0 0.0
      %385 = vmatpush1.msra.mxu0 0.0
      %386 = vmatprep.subr.mxu0 0.0
      %387 = vmatpush1.msra.mxu0 0.0
      %388 = vmatprep.subr.mxu0 0.0
      %389 = vmatpush1.msra.mxu0 %v380
      %390 = vmatprep.subr.mxu0 0.0
      %391 = vmatpush1.msra.mxu0 %v272
      %392 = vmatprep.subr.mxu0 0.0
      %393 = vmatpush1.msra.mxu0 %v271
      %394 = vmatprep.subr.mxu0 0.0
      %395 = vmatpush1.msra.mxu0 %v270
      %396 = vmatprep.subr.mxu0 0.0
      %397 = vmatpush1.msra.mxu0 %v269
      %398 = vmatprep.subr.mxu0 0.0
      %399 = vmatpush1.msra.mxu0 %v268
      %400 = vmatprep.subr.mxu0 0.0
      %401 = vmatpush1.msra.mxu0 %v267
      %402 = vmatprep.subr.mxu0 0.0
      %403 = vmatpush1.msra.mxu0 %v266
      %404 = vmatprep.subr.mxu0 0.0
      %405 = vmatpush1.msra.mxu0 %v265
      %406 = vmatprep.subr.mxu0 0.0
      %407 = vmatpush1.msra.mxu0 %v264
      %408 = vmatprep.subr.mxu0 0.0
      %409 = vmatpush1.msra.mxu0 %v263
      %410 = vmatprep.subr.mxu0 0.0
      %411 = vmatpush1.msra.mxu0 %v262
      %412 = vmatprep.subr.mxu0 0.0
      %413 = vmatpush1.msra.mxu0 %v261
      %414 = vmatprep.subr.mxu0 0.0
      %415 = vmatpush2.msra.mxu0 0.0
      %416 = vmatprep.subr.mxu0 0.0
      %417 = vmatpush2.msra.mxu0 0.0
      %418 = vmatprep.subr.mxu0 0.0
      %419 = vmatpush2.msra.mxu0 0.0
      %420 = vmatprep.subr.mxu0 0.0
      %421 = vmatpush2.msra.mxu0 0.0
      %422 = vmatprep.subr.mxu0 0.0
      %423 = vmatpush2.msra.mxu0 0.0
      %424 = vmatprep.subr.mxu0 0.0
      %425 = vmatpush2.msra.mxu0 0.0
      %426 = vmatprep.subr.mxu0 0.0
      %427 = vmatpush2.msra.mxu0 0.0
      %428 = vmatprep.subr.mxu0 0.0
      %429 = vmatpush2.msra.mxu0 0.0
      %430 = vmatprep.subr.mxu0 0.0
      %431 = vmatpush2.msra.mxu0 0.0
      %432 = vmatprep.subr.mxu0 0.0
      %433 = vmatpush2.msra.mxu0 0.0
      %434 = vmatprep.subr.mxu0 0.0
      %435 = vmatpush2.msra.mxu0 0.0
      %436 = vmatprep.subr.mxu0 0.0
      %437 = vmatpush2.msra.mxu0 0.0
      %438 = vmatprep.subr.mxu0 0.0
      %439 = vmatpush2.msra.mxu0 0.0
      %440 = vmatprep.subr.mxu0 0.0
      %441 = vmatpush2.msra.mxu0 0.0
      %442 = vmatprep.subr.mxu0 0.0
      %443 = vmatpush2.msra.mxu0 0.0
      %444 = vmatprep.subr.mxu0 0.0
      %445 = vmatpush2.msra.mxu0 0.0
      %446 = vmatprep.mubr.f32.mxu0 0.0
      %447 = vmatmul.mubr.f32.gmra.mxu0 %v283
      %v448 = vpop.f32.mrf.mxu0
      %v449 = vadd.f32 %v279, %v448
      %v450 = vpop.f32.mrf.mxu0
      %451 = vmatprep.mubr.f32.mxu0 0.0
      %452 = vmatmul.mubr.f32.gmra.mxu0 %v286
      %v453 = vpop.f32.mrf.mxu0
      %v454 = vadd.f32 %v279, %v453
      %v455 = vpop.f32.mrf.mxu0
      %456 = vmatprep.mubr.f32.mxu0 0.0
      %457 = vmatmul.mubr.f32.gmra.mxu0 %v289
      %v458 = vpop.f32.mrf.mxu0
      %v459 = vadd.f32 %v279, %v458
      %v460 = vpop.f32.mrf.mxu0
      %461 = vmatprep.mubr.f32.mxu0 0.0
      %462 = vmatmul.mubr.f32.gmra.mxu0 %v292
      %v463 = vpop.f32.mrf.mxu0
      %v464 = vadd.f32 %v279, %v463
      %v465 = vpop.f32.mrf.mxu0
      %466 = vmatprep.mubr.f32.mxu0 0.0
      %467 = vmatmul.mubr.f32.gmra.mxu0 %v295
      %v468 = vpop.f32.mrf.mxu0
      %v469 = vadd.f32 %v279, %v468
      %v470 = vpop.f32.mrf.mxu0
      %471 = vmatprep.mubr.f32.mxu0 0.0
      %472 = vmatmul.mubr.f32.gmra.mxu0 %v298
      %v473 = vpop.f32.mrf.mxu0
      %v474 = vadd.f32 %v279, %v473
      %v475 = vpop.f32.mrf.mxu0
      %476 = vmatprep.mubr.f32.mxu0 0.0
      %477 = vmatmul.mubr.f32.gmra.mxu0 %v301
      %v478 = vpop.f32.mrf.mxu0
      %v479 = vadd.f32 %v279, %v478
      %v480 = vpop.f32.mrf.mxu0
      %481 = vmatprep.mubr.f32.mxu0 0.0
      %482 = vmatmul.mubr.f32.gmra.mxu0 %v304
      %v483 = vpop.f32.mrf.mxu0
      %v484 = vadd.f32 %v279, %v483
      %v485 = vpop.f32.mrf.mxu0
      %486 = vmatprep.mubr.f32.mxu0 0.0
      %487 = vmatmul.mubr.f32.gmra.mxu0 %v307
      %v488 = vpop.f32.mrf.mxu0
      %v489 = vadd.f32 %v279, %v488
      %v490 = vpop.f32.mrf.mxu0
      %491 = vmatprep.mubr.f32.mxu0 0.0
      %492 = vmatmul.mubr.f32.gmra.mxu0 %v310
      %v493 = vpop.f32.mrf.mxu0
      %v494 = vadd.f32 %v279, %v493
      %v495 = vpop.f32.mrf.mxu0
      %496 = vmatprep.mubr.f32.mxu0 0.0
      %497 = vmatmul.mubr.f32.gmra.mxu0 %v313
      %v498 = vpop.f32.mrf.mxu0
      %v499 = vadd.f32 %v279, %v498
      %v500 = vpop.f32.mrf.mxu0
      %501 = vmatprep.mubr.f32.mxu0 0.0
      %502 = vmatmul.mubr.f32.gmra.mxu0 %v316
      %v503 = vpop.f32.mrf.mxu0
      %v504 = vadd.f32 %v279, %v503
      %v505 = vpop.f32.mrf.mxu0
      %506 = vmatprep.mubr.f32.mxu0 0.0
      %507 = vmatmul.mubr.f32.gmra.mxu0 %v319
      %v508 = vpop.f32.mrf.mxu0
      %v509 = vadd.f32 %v279, %v508
      %v510 = vpop.f32.mrf.mxu0
      %511 = vmatprep.mubr.f32.mxu0 0.0
      %512 = vmatmul.mubr.f32.gmra.mxu0 %v322
      %v513 = vpop.f32.mrf.mxu0
      %v514 = vadd.f32 %v279, %v513
      %v515 = vpop.f32.mrf.mxu0
      %516 = vmatprep.mubr.f32.mxu0 0.0
      %517 = vmatmul.mubr.f32.gmra.mxu0 %v325
      %v518 = vpop.f32.mrf.mxu0
      %v519 = vadd.f32 %v279, %v518
      %v520 = vpop.f32.mrf.mxu0
      %521 = vmatprep.mubr.f32.mxu0 0.0
      %522 = vmatmul.mubr.f32.gmra.mxu0 %v328
      %v523 = vpop.f32.mrf.mxu0
      %v524 = vadd.f32 %v279, %v523
      %v525 = vpop.f32.mrf.mxu0
      %526 = vmatprep.mubr.f32.mxu0 0.0
      %527 = vmatmul.mubr.f32.gmra.mxu0 %v331
      %v528 = vpop.f32.mrf.mxu0
      %v529 = vadd.f32 %v279, %v528
      %v530 = vpop.f32.mrf.mxu0
      %531 = vmatprep.mubr.f32.mxu0 0.0
      %532 = vmatmul.mubr.f32.gmra.mxu0 %v334
      %v533 = vpop.f32.mrf.mxu0
      %v534 = vadd.f32 %v279, %v533
      %v535 = vpop.f32.mrf.mxu0
      %536 = vmatprep.mubr.f32.mxu0 0.0
      %537 = vmatmul.mubr.f32.gmra.mxu0 %v337
      %v538 = vpop.f32.mrf.mxu0
      %v539 = vadd.f32 %v279, %v538
      %v540 = vpop.f32.mrf.mxu0
      %541 = vmatprep.mubr.f32.mxu0 0.0
      %542 = vmatmul.mubr.f32.gmra.mxu0 %v340
      %v543 = vpop.f32.mrf.mxu0
      %v544 = vadd.f32 %v279, %v543
      %v545 = vpop.f32.mrf.mxu0
      %546 = vmatprep.mubr.f32.mxu0 0.0
      %547 = vmatmul.mubr.f32.gmra.mxu0 %v343
      %v548 = vpop.f32.mrf.mxu0
      %v549 = vadd.f32 %v279, %v548
      %v550 = vpop.f32.mrf.mxu0
      %551 = vmatprep.mubr.f32.mxu0 0.0
      %552 = vmatmul.mubr.f32.gmra.mxu0 %v346
      %v553 = vpop.f32.mrf.mxu0
      %v554 = vadd.f32 %v279, %v553
      %v555 = vpop.f32.mrf.mxu0
      %556 = vmatprep.mubr.f32.mxu0 0.0
      %557 = vmatmul.mubr.f32.gmra.mxu0 %v349
      %v558 = vpop.f32.mrf.mxu0
      %v559 = vadd.f32 %v279, %v558
      %v560 = vpop.f32.mrf.mxu0
      %561 = vmatprep.mubr.f32.mxu0 0.0
      %562 = vmatmul.mubr.f32.gmra.mxu0 %v352
      %v563 = vpop.f32.mrf.mxu0
      %v564 = vadd.f32 %v279, %v563
      %v565 = vpop.f32.mrf.mxu0
      %566 = vmatprep.mubr.f32.mxu0 0.0
      %567 = vmatmul.mubr.f32.gmra.mxu0 %v355
      %v568 = vpop.f32.mrf.mxu0
      %v569 = vadd.f32 %v279, %v568
      %v570 = vpop.f32.mrf.mxu0
      %571 = vmatprep.mubr.f32.mxu0 0.0
      %572 = vmatmul.mubr.f32.gmra.mxu0 %v358
      %v573 = vpop.f32.mrf.mxu0
      %v574 = vadd.f32 %v279, %v573
      %v575 = vpop.f32.mrf.mxu0
      %576 = vmatprep.mubr.f32.mxu0 0.0
      %577 = vmatmul.mubr.f32.gmra.mxu0 %v361
      %v578 = vpop.f32.mrf.mxu0
      %v579 = vadd.f32 %v279, %v578
      %v580 = vpop.f32.mrf.mxu0
      %581 = vmatprep.mubr.f32.mxu0 0.0
      %582 = vmatmul.mubr.f32.gmra.mxu0 %v364
      %v583 = vpop.f32.mrf.mxu0
      %v584 = vadd.f32 %v279, %v583
      %v585 = vpop.f32.mrf.mxu0
      %586 = vmatprep.mubr.f32.mxu0 0.0
      %587 = vmatmul.mubr.f32.gmra.mxu0 %v367
      %v588 = vpop.f32.mrf.mxu0
      %v589 = vadd.f32 %v279, %v588
      %v590 = vpop.f32.mrf.mxu0
      %591 = vmatprep.mubr.f32.mxu0 0.0
      %592 = vmatmul.mubr.f32.gmra.mxu0 %v370
      %v593 = vpop.f32.mrf.mxu0
      %v594 = vadd.f32 %v279, %v593
      %v595 = vpop.f32.mrf.mxu0
      %596 = vmatprep.mubr.f32.mxu0 0.0
      %597 = vmatmul.mubr.f32.gmra.mxu0 %v373
      %v598 = vpop.f32.mrf.mxu0
      %v599 = vadd.f32 %v279, %v598
      %v600 = vpop.f32.mrf.mxu0
      %601 = vmatprep.mubr.f32.mxu0 0.0
      %602 = vmatmul.mubr.f32.gmra.mxu0 %v376
      %v603 = vpop.f32.mrf.mxu0
      %v604 = vadd.f32 %v279, %v603
      %v605 = vpop.f32.mrf.mxu0
      %606 = vdwg.mxu0
      %v607 = vmax.f32 %v449, 0.0
      %v608 = vmax.f32 %v454, 0.0
      %v609 = vmax.f32 %v459, 0.0
      %v610 = vmax.f32 %v464, 0.0
      %v611 = vmax.f32 %v469, 0.0
      %v612 = vmax.f32 %v474, 0.0
      %v613 = vmax.f32 %v479, 0.0
      %v614 = vmax.f32 %v484, 0.0
      %v615 = vmax.f32 %v489, 0.0
      %v616 = vmax.f32 %v494, 0.0
      %v617 = vmax.f32 %v499, 0.0
      %v618 = vmax.f32 %v504, 0.0
      %v619 = vmax.f32 %v509, 0.0
      %v620 = vmax.f32 %v514, 0.0
      %v621 = vmax.f32 %v519, 0.0
      %v622 = vmax.f32 %v524, 0.0
      %v623 = vmax.f32 %v529, 0.0
      %v624 = vmax.f32 %v534, 0.0
      %v625 = vmax.f32 %v539, 0.0
      %v626 = vmax.f32 %v544, 0.0
      %v627 = vmax.f32 %v549, 0.0
      %v628 = vmax.f32 %v554, 0.0
      %v629 = vmax.f32 %v559, 0.0
      %v630 = vmax.f32 %v564, 0.0
      %v631 = vmax.f32 %v569, 0.0
      %v632 = vmax.f32 %v574, 0.0
      %v633 = vmax.f32 %v579, 0.0
      %v634 = vmax.f32 %v584, 0.0
      %v635 = vmax.f32 %v589, 0.0
      %v636 = vmax.f32 %v594, 0.0
      %v637 = vmax.f32 %v599, 0.0
      %v638 = vmax.f32 %v604, 0.0
      %v639 = vld [vmem:[%s3] sm:$0xff]
      %v640 = vld [vmem:[%s3 + $0x8] sm:$0xff]
      %v641 = vld [vmem:[%s3 + $0x10] sm:$0xff]
      %v642 = vld [vmem:[%s3 + $0x18] sm:$0xff]
      %v643 = vld [vmem:[%s3 + $0x20] sm:$0xff]
      %v644 = vld [vmem:[%s3 + $0x28] sm:$0xff]
      %v645 = vld [vmem:[%s3 + $0x30] sm:$0xff]
      %v646 = vld [vmem:[%s3 + $0x38] sm:$0xff]
      %v647 = vld [vmem:[%s3 + $0x40] sm:$0xff]
      %v648 = vld [vmem:[%s3 + $0x48] sm:$0xff]
      %v649 = vld [vmem:[%s3 + $0x50] sm:$0xff]
      %v650 = vld [vmem:[%s3 + $0x58] sm:$0xff]
      %v651 = vld [vmem:[%s3 + $0x60] sm:$0xff]
      %v652 = vld [vmem:[%s3 + $0x68] sm:$0xff]
      %v653 = vld [vmem:[%s3 + $0x70] sm:$0xff]
      %v654 = vld [vmem:[%s3 + $0x78] sm:$0xff]
      %s655 = sld [smem:[#allocation2]]
      %v656 = vstv %s655
      %657 = vmatprep.subr.mxu0 0.0
      %658 = vmatpush1.msra.mxu0 %v654
      %659 = vmatprep.subr.mxu0 0.0
      %660 = vmatpush1.msra.mxu0 %v653
      %661 = vmatprep.subr.mxu0 0.0
      %662 = vmatpush1.msra.mxu0 %v652
      %663 = vmatprep.subr.mxu0 0.0
      %664 = vmatpush1.msra.mxu0 %v651
      %665 = vmatprep.subr.mxu0 0.0
      %666 = vmatpush1.msra.mxu0 %v650
      %667 = vmatprep.subr.mxu0 0.0
      %668 = vmatpush1.msra.mxu0 %v649
      %669 = vmatprep.subr.mxu0 0.0
      %670 = vmatpush1.msra.mxu0 %v648
      %671 = vmatprep.subr.mxu0 0.0
      %672 = vmatpush1.msra.mxu0 %v647
      %673 = vmatprep.subr.mxu0 0.0
      %674 = vmatpush1.msra.mxu0 %v646
      %675 = vmatprep.subr.mxu0 0.0
      %676 = vmatpush1.msra.mxu0 %v645
      %677 = vmatprep.subr.mxu0 0.0
      %678 = vmatpush1.msra.mxu0 %v644
      %679 = vmatprep.subr.mxu0 0.0
      %680 = vmatpush1.msra.mxu0 %v643
      %681 = vmatprep.subr.mxu0 0.0
      %682 = vmatpush1.msra.mxu0 %v642
      %683 = vmatprep.subr.mxu0 0.0
      %684 = vmatpush1.msra.mxu0 %v641
      %685 = vmatprep.subr.mxu0 0.0
      %686 = vmatpush1.msra.mxu0 %v640
      %687 = vmatprep.subr.mxu0 0.0
      %688 = vmatpush1.msra.mxu0 %v639
      %689 = vmatprep.subr.mxu0 0.0
      %690 = vmatpush2.msra.mxu0 0.0
      %691 = vmatprep.subr.mxu0 0.0
      %692 = vmatpush2.msra.mxu0 0.0
      %693 = vmatprep.subr.mxu0 0.0
      %694 = vmatpush2.msra.mxu0 0.0
      %695 = vmatprep.subr.mxu0 0.0
      %696 = vmatpush2.msra.mxu0 0.0
      %697 = vmatprep.subr.mxu0 0.0
      %698 = vmatpush2.msra.mxu0 0.0
      %699 = vmatprep.subr.mxu0 0.0
      %700 = vmatpush2.msra.mxu0 0.0
      %701 = vmatprep.subr.mxu0 0.0
      %702 = vmatpush2.msra.mxu0 0.0
      %703 = vmatprep.subr.mxu0 0.0
      %704 = vmatpush2.msra.mxu0 0.0
      %705 = vmatprep.subr.mxu0 0.0
      %706 = vmatpush2.msra.mxu0 0.0
      %707 = vmatprep.subr.mxu0 0.0
      %708 = vmatpush2.msra.mxu0 0.0
      %709 = vmatprep.subr.mxu0 0.0
      %710 = vmatpush2.msra.mxu0 0.0
      %711 = vmatprep.subr.mxu0 0.0
      %712 = vmatpush2.msra.mxu0 0.0
      %713 = vmatprep.subr.mxu0 0.0
      %714 = vmatpush2.msra.mxu0 0.0
      %715 = vmatprep.subr.mxu0 0.0
      %716 = vmatpush2.msra.mxu0 0.0
      %717 = vmatprep.subr.mxu0 0.0
      %718 = vmatpush2.msra.mxu0 0.0
      %719 = vmatprep.subr.mxu0 0.0
      %720 = vmatpush2.msra.mxu0 0.0
      %721 = vmatprep.mubr.f32.mxu0 0.0
      %722 = vmatmul.mubr.f32.gmra.mxu0 %v607
      %v723 = vpop.f32.mrf.mxu0
      %v724 = vadd.f32 %v656, %v723
      %v725 = vpop.f32.mrf.mxu0
      %726 = vmatprep.mubr.f32.mxu0 0.0
      %727 = vmatmul.mubr.f32.gmra.mxu0 %v608
      %v728 = vpop.f32.mrf.mxu0
      %v729 = vadd.f32 %v656, %v728
      %v730 = vpop.f32.mrf.mxu0
      %731 = vmatprep.mubr.f32.mxu0 0.0
      %732 = vmatmul.mubr.f32.gmra.mxu0 %v609
      %v733 = vpop.f32.mrf.mxu0
      %v734 = vadd.f32 %v656, %v733
      %v735 = vpop.f32.mrf.mxu0
      %736 = vmatprep.mubr.f32.mxu0 0.0
      %737 = vmatmul.mubr.f32.gmra.mxu0 %v610
      %v738 = vpop.f32.mrf.mxu0
      %v739 = vadd.f32 %v656, %v738
      %v740 = vpop.f32.mrf.mxu0
      %741 = vmatprep.mubr.f32.mxu0 0.0
      %742 = vmatmul.mubr.f32.gmra.mxu0 %v611
      %v743 = vpop.f32.mrf.mxu0
      %v744 = vadd.f32 %v656, %v743
      %v745 = vpop.f32.mrf.mxu0
      %746 = vmatprep.mubr.f32.mxu0 0.0
      %747 = vmatmul.mubr.f32.gmra.mxu0 %v612
      %v748 = vpop.f32.mrf.mxu0
      %v749 = vadd.f32 %v656, %v748
      %v750 = vpop.f32.mrf.mxu0
      %751 = vmatprep.mubr.f32.mxu0 0.0
      %752 = vmatmul.mubr.f32.gmra.mxu0 %v613
      %v753 = vpop.f32.mrf.mxu0
      %v754 = vadd.f32 %v656, %v753
      %v755 = vpop.f32.mrf.mxu0
      %756 = vmatprep.mubr.f32.mxu0 0.0
      %757 = vmatmul.mubr.f32.gmra.mxu0 %v614
      %v758 = vpop.f32.mrf.mxu0
      %v759 = vadd.f32 %v656, %v758
      %v760 = vpop.f32.mrf.mxu0
      %761 = vmatprep.mubr.f32.mxu0 0.0
      %762 = vmatmul.mubr.f32.gmra.mxu0 %v615
      %v763 = vpop.f32.mrf.mxu0
      %v764 = vadd.f32 %v656, %v763
      %v765 = vpop.f32.mrf.mxu0
      %766 = vmatprep.mubr.f32.mxu0 0.0
      %767 = vmatmul.mubr.f32.gmra.mxu0 %v616
      %v768 = vpop.f32.mrf.mxu0
      %v769 = vadd.f32 %v656, %v768
      %v770 = vpop.f32.mrf.mxu0
      %771 = vmatprep.mubr.f32.mxu0 0.0
      %772 = vmatmul.mubr.f32.gmra.mxu0 %v617
      %v773 = vpop.f32.mrf.mxu0
      %v774 = vadd.f32 %v656, %v773
      %v775 = vpop.f32.mrf.mxu0
      %776 = vmatprep.mubr.f32.mxu0 0.0
      %777 = vmatmul.mubr.f32.gmra.mxu0 %v618
      %v778 = vpop.f32.mrf.mxu0
      %v779 = vadd.f32 %v656, %v778
      %v780 = vpop.f32.mrf.mxu0
      %781 = vmatprep.mubr.f32.mxu0 0.0
      %782 = vmatmul.mubr.f32.gmra.mxu0 %v619
      %v783 = vpop.f32.mrf.mxu0
      %v784 = vadd.f32 %v656, %v783
      %v785 = vpop.f32.mrf.mxu0
      %786 = vmatprep.mubr.f32.mxu0 0.0
      %787 = vmatmul.mubr.f32.gmra.mxu0 %v620
      %v788 = vpop.f32.mrf.mxu0
      %v789 = vadd.f32 %v656, %v788
      %v790 = vpop.f32.mrf.mxu0
      %791 = vmatprep.mubr.f32.mxu0 0.0
      %792 = vmatmul.mubr.f32.gmra.mxu0 %v621
      %v793 = vpop.f32.mrf.mxu0
      %v794 = vadd.f32 %v656, %v793
      %v795 = vpop.f32.mrf.mxu0
      %796 = vmatprep.mubr.f32.mxu0 0.0
      %797 = vmatmul.mubr.f32.gmra.mxu0 %v622
      %v798 = vpop.f32.mrf.mxu0
      %v799 = vadd.f32 %v656, %v798
      %v800 = vpop.f32.mrf.mxu0
      %801 = vmatprep.mubr.f32.mxu0 0.0
      %802 = vmatmul.mubr.f32.gmra.mxu0 %v623
      %v803 = vpop.f32.mrf.mxu0
      %v804 = vadd.f32 %v656, %v803
      %v805 = vpop.f32.mrf.mxu0
      %806 = vmatprep.mubr.f32.mxu0 0.0
      %807 = vmatmul.mubr.f32.gmra.mxu0 %v624
      %v808 = vpop.f32.mrf.mxu0
      %v809 = vadd.f32 %v656, %v808
      %v810 = vpop.f32.mrf.mxu0
      %811 = vmatprep.mubr.f32.mxu0 0.0
      %812 = vmatmul.mubr.f32.gmra.mxu0 %v625
      %v813 = vpop.f32.mrf.mxu0
      %v814 = vadd.f32 %v656, %v813
      %v815 = vpop.f32.mrf.mxu0
      %816 = vmatprep.mubr.f32.mxu0 0.0
      %817 = vmatmul.mubr.f32.gmra.mxu0 %v626
      %v818 = vpop.f32.mrf.mxu0
      %v819 = vadd.f32 %v656, %v818
      %v820 = vpop.f32.mrf.mxu0
      %821 = vmatprep.mubr.f32.mxu0 0.0
      %822 = vmatmul.mubr.f32.gmra.mxu0 %v627
      %v823 = vpop.f32.mrf.mxu0
      %v824 = vadd.f32 %v656, %v823
      %v825 = vpop.f32.mrf.mxu0
      %826 = vmatprep.mubr.f32.mxu0 0.0
      %827 = vmatmul.mubr.f32.gmra.mxu0 %v628
      %v828 = vpop.f32.mrf.mxu0
      %v829 = vadd.f32 %v656, %v828
      %v830 = vpop.f32.mrf.mxu0
      %831 = vmatprep.mubr.f32.mxu0 0.0
      %832 = vmatmul.mubr.f32.gmra.mxu0 %v629
      %v833 = vpop.f32.mrf.mxu0
      %v834 = vadd.f32 %v656, %v833
      %v835 = vpop.f32.mrf.mxu0
      %836 = vmatprep.mubr.f32.mxu0 0.0
      %837 = vmatmul.mubr.f32.gmra.mxu0 %v630
      %v838 = vpop.f32.mrf.mxu0
      %v839 = vadd.f32 %v656, %v838
      %v840 = vpop.f32.mrf.mxu0
      %841 = vmatprep.mubr.f32.mxu0 0.0
      %842 = vmatmul.mubr.f32.gmra.mxu0 %v631
      %v843 = vpop.f32.mrf.mxu0
      %v844 = vadd.f32 %v656, %v843
      %v845 = vpop.f32.mrf.mxu0
      %846 = vmatprep.mubr.f32.mxu0 0.0
      %847 = vmatmul.mubr.f32.gmra.mxu0 %v632
      %v848 = vpop.f32.mrf.mxu0
      %v849 = vadd.f32 %v656, %v848
      %v850 = vpop.f32.mrf.mxu0
      %851 = vmatprep.mubr.f32.mxu0 0.0
      %852 = vmatmul.mubr.f32.gmra.mxu0 %v633
      %v853 = vpop.f32.mrf.mxu0
      %v854 = vadd.f32 %v656, %v853
      %v855 = vpop.f32.mrf.mxu0
      %856 = vmatprep.mubr.f32.mxu0 0.0
      %857 = vmatmul.mubr.f32.gmra.mxu0 %v634
      %v858 = vpop.f32.mrf.mxu0
      %v859 = vadd.f32 %v656, %v858
      %v860 = vpop.f32.mrf.mxu0
      %861 = vmatprep.mubr.f32.mxu0 0.0
      %862 = vmatmul.mubr.f32.gmra.mxu0 %v635
      %v863 = vpop.f32.mrf.mxu0
      %v864 = vadd.f32 %v656, %v863
      %v865 = vpop.f32.mrf.mxu0
      %866 = vmatprep.mubr.f32.mxu0 0.0
      %867 = vmatmul.mubr.f32.gmra.mxu0 %v636
      %v868 = vpop.f32.mrf.mxu0
      %v869 = vadd.f32 %v656, %v868
      %v870 = vpop.f32.mrf.mxu0
      %871 = vmatprep.mubr.f32.mxu0 0.0
      %872 = vmatmul.mubr.f32.gmra.mxu0 %v637
      %v873 = vpop.f32.mrf.mxu0
      %v874 = vadd.f32 %v656, %v873
      %v875 = vpop.f32.mrf.mxu0
      %876 = vmatprep.mubr.f32.mxu0 0.0
      %877 = vmatmul.mubr.f32.gmra.mxu0 %v638
      %v878 = vpop.f32.mrf.mxu0
      %v879 = vadd.f32 %v656, %v878
      %v880 = vpop.f32.mrf.mxu0
      %881 = vdwg.mxu0
      %v882 = vxor.u32 %v724, 2147483648
      %v883 = vxor.u32 %v729, 2147483648
      %v884 = vxor.u32 %v734, 2147483648
      %v885 = vxor.u32 %v739, 2147483648
      %v886 = vxor.u32 %v744, 2147483648
      %v887 = vxor.u32 %v749, 2147483648
      %v888 = vxor.u32 %v754, 2147483648
      %v889 = vxor.u32 %v759, 2147483648
      %v890 = vxor.u32 %v764, 2147483648
      %v891 = vxor.u32 %v769, 2147483648
      %v892 = vxor.u32 %v774, 2147483648
      %v893 = vxor.u32 %v779, 2147483648
      %v894 = vxor.u32 %v784, 2147483648
      %v895 = vxor.u32 %v789, 2147483648
      %v896 = vxor.u32 %v794, 2147483648
      %v897 = vxor.u32 %v799, 2147483648
      %v898 = vxor.u32 %v804, 2147483648
      %v899 = vxor.u32 %v809, 2147483648
      %v900 = vxor.u32 %v814, 2147483648
      %v901 = vxor.u32 %v819, 2147483648
      %v902 = vxor.u32 %v824, 2147483648
      %v903 = vxor.u32 %v829, 2147483648
      %v904 = vxor.u32 %v834, 2147483648
      %v905 = vxor.u32 %v839, 2147483648
      %v906 = vxor.u32 %v844, 2147483648
      %v907 = vxor.u32 %v849, 2147483648
      %v908 = vxor.u32 %v854, 2147483648
      %v909 = vxor.u32 %v859, 2147483648
      %v910 = vxor.u32 %v864, 2147483648
      %v911 = vxor.u32 %v869, 2147483648
      %v912 = vxor.u32 %v874, 2147483648
      %v913 = vxor.u32 %v879, 2147483648
      %v914 = vmul.f32 %v882, 1.442695
      %v915 = vpow.pop %v914
      %v916 = vmul.f32 %v883, 1.442695
      %v917 = vpow.pop %v916
      %v918 = vmul.f32 %v884, 1.442695
      %v919 = vpow.pop %v918
      %v920 = vmul.f32 %v885, 1.442695
      %v921 = vpow.pop %v920
      %v922 = vmul.f32 %v886, 1.442695
      %v923 = vpow.pop %v922
      %v924 = vmul.f32 %v887, 1.442695
      %v925 = vpow.pop %v924
      %v926 = vmul.f32 %v888, 1.442695
      %v927 = vpow.pop %v926
      %v928 = vmul.f32 %v889, 1.442695
      %v929 = vpow.pop %v928
      %v930 = vmul.f32 %v890, 1.442695
      %v931 = vpow.pop %v930
      %v932 = vmul.f32 %v891, 1.442695
      %v933 = vpow.pop %v932
      %v934 = vmul.f32 %v892, 1.442695
      %v935 = vpow.pop %v934
      %v936 = vmul.f32 %v893, 1.442695
      %v937 = vpow.pop %v936
      %v938 = vmul.f32 %v894, 1.442695
      %v939 = vpow.pop %v938
      %v940 = vmul.f32 %v895, 1.442695
      %v941 = vpow.pop %v940
      %v942 = vmul.f32 %v896, 1.442695
      %v943 = vpow.pop %v942
      %v944 = vmul.f32 %v897, 1.442695
      %v945 = vpow.pop %v944
      %v946 = vmul.f32 %v898, 1.442695
      %v947 = vpow.pop %v946
      %v948 = vmul.f32 %v899, 1.442695
      %v949 = vpow.pop %v948
      %v950 = vmul.f32 %v900, 1.442695
      %v951 = vpow.pop %v950
      %v952 = vmul.f32 %v901, 1.442695
      %v953 = vpow.pop %v952
      %v954 = vmul.f32 %v902, 1.442695
      %v955 = vpow.pop %v954
      %v956 = vmul.f32 %v903, 1.442695
      %v957 = vpow.pop %v956
      %v958 = vmul.f32 %v904, 1.442695
      %v959 = vpow.pop %v958
      %v960 = vmul.f32 %v905, 1.442695
      %v961 = vpow.pop %v960
      %v962 = vmul.f32 %v906, 1.442695
      %v963 = vpow.pop %v962
      %v964 = vmul.f32 %v907, 1.442695
      %v965 = vpow.pop %v964
      %v966 = vmul.f32 %v908, 1.442695
      %v967 = vpow.pop %v966
      %v968 = vmul.f32 %v909, 1.442695
      %v969 = vpow.pop %v968
      %v970 = vmul.f32 %v910, 1.442695
      %v971 = vpow.pop %v970
      %v972 = vmul.f32 %v911, 1.442695
      %v973 = vpow.pop %v972
      %v974 = vmul.f32 %v912, 1.442695
      %v975 = vpow.pop %v974
      %v976 = vmul.f32 %v913, 1.442695
      %v977 = vpow.pop %v976
      %v978 = vadd.f32 %v915, 1.0
      %v979 = vadd.f32 %v917, 1.0
      %v980 = vadd.f32 %v919, 1.0
      %v981 = vadd.f32 %v921, 1.0
      %v982 = vadd.f32 %v923, 1.0
      %v983 = vadd.f32 %v925, 1.0
      %v984 = vadd.f32 %v927, 1.0
      %v985 = vadd.f32 %v929, 1.0
      %v986 = vadd.f32 %v931, 1.0
      %v987 = vadd.f32 %v933, 1.0
      %v988 = vadd.f32 %v935, 1.0
      %v989 = vadd.f32 %v937, 1.0
      %v990 = vadd.f32 %v939, 1.0
      %v991 = vadd.f32 %v941, 1.0
      %v992 = vadd.f32 %v943, 1.0
      %v993 = vadd.f32 %v945, 1.0
      %v994 = vadd.f32 %v947, 1.0
      %v995 = vadd.f32 %v949, 1.0
      %v996 = vadd.f32 %v951, 1.0
      %v997 = vadd.f32 %v953, 1.0
      %v998 = vadd.f32 %v955, 1.0
      %v999 = vadd.f32 %v957, 1.0
      %v1000 = vadd.f32 %v959, 1.0
      %v1001 = vadd.f32 %v961, 1.0
      %v1002 = vadd.f32 %v963, 1.0
      %v1003 = vadd.f32 %v965, 1.0
      %v1004 = vadd.f32 %v967, 1.0
      %v1005 = vadd.f32 %v969, 1.0
      %v1006 = vadd.f32 %v971, 1.0
      %v1007 = vadd.f32 %v973, 1.0
      %v1008 = vadd.f32 %v975, 1.0
      %v1009 = vadd.f32 %v977, 1.0
      %v1010 = vrcp.pop %v978
      %v1011 = vmul.f32 1.0, %v1010
      %v1012 = vrcp.pop %v979
      %v1013 = vmul.f32 1.0, %v1012
      %v1014 = vrcp.pop %v980
      %v1015 = vmul.f32 1.0, %v1014
      %v1016 = vrcp.pop %v981
      %v1017 = vmul.f32 1.0, %v1016
      %v1018 = vrcp.pop %v982
      %v1019 = vmul.f32 1.0, %v1018
      %v1020 = vrcp.pop %v983
      %v1021 = vmul.f32 1.0, %v1020
      %v1022 = vrcp.pop %v984
      %v1023 = vmul.f32 1.0, %v1022
      %v1024 = vrcp.pop %v985
      %v1025 = vmul.f32 1.0, %v1024
      %v1026 = vrcp.pop %v986
      %v1027 = vmul.f32 1.0, %v1026
      %v1028 = vrcp.pop %v987
      %v1029 = vmul.f32 1.0, %v1028
      %v1030 = vrcp.pop %v988
      %v1031 = vmul.f32 1.0, %v1030
      %v1032 = vrcp.pop %v989
      %v1033 = vmul.f32 1.0, %v1032
      %v1034 = vrcp.pop %v990
      %v1035 = vmul.f32 1.0, %v1034
      %v1036 = vrcp.pop %v991
      %v1037 = vmul.f32 1.0, %v1036
      %v1038 = vrcp.pop %v992
      %v1039 = vmul.f32 1.0, %v1038
      %v1040 = vrcp.pop %v993
      %v1041 = vmul.f32 1.0, %v1040
      %v1042 = vrcp.pop %v994
      %v1043 = vmul.f32 1.0, %v1042
      %v1044 = vrcp.pop %v995
      %v1045 = vmul.f32 1.0, %v1044
      %v1046 = vrcp.pop %v996
      %v1047 = vmul.f32 1.0, %v1046
      %v1048 = vrcp.pop %v997
      %v1049 = vmul.f32 1.0, %v1048
      %v1050 = vrcp.pop %v998
      %v1051 = vmul.f32 1.0, %v1050
      %v1052 = vrcp.pop %v999
      %v1053 = vmul.f32 1.0, %v1052
      %v1054 = vrcp.pop %v1000
      %v1055 = vmul.f32 1.0, %v1054
      %v1056 = vrcp.pop %v1001
      %v1057 = vmul.f32 1.0, %v1056
      %v1058 = vrcp.pop %v1002
      %v1059 = vmul.f32 1.0, %v1058
      %v1060 = vrcp.pop %v1003
      %v1061 = vmul.f32 1.0, %v1060
      %v1062 = vrcp.pop %v1004
      %v1063 = vmul.f32 1.0, %v1062
      %v1064 = vrcp.pop %v1005
      %v1065 = vmul.f32 1.0, %v1064
      %v1066 = vrcp.pop %v1006
      %v1067 = vmul.f32 1.0, %v1066
      %v1068 = vrcp.pop %v1007
      %v1069 = vmul.f32 1.0, %v1068
      %v1070 = vrcp.pop %v1008
      %v1071 = vmul.f32 1.0, %v1070
      %v1072 = vrcp.pop %v1009
      %v1073 = vmul.f32 1.0, %v1072
      %vm1074 = vcmask 7168
      %1075 = vst.msk [vmem:[%s227] sm:$0xff] %vm1074, %v1011
      %1076 = vst.msk [vmem:[%s227 + $0x8] sm:$0xff] %vm1074, %v1013
      %1077 = vst.msk [vmem:[%s227 + $0x10] sm:$0xff] %vm1074, %v1015
      %1078 = vst.msk [vmem:[%s227 + $0x18] sm:$0xff] %vm1074, %v1017
      %1079 = vst.msk [vmem:[%s227 + $0x20] sm:$0xff] %vm1074, %v1019
      %1080 = vst.msk [vmem:[%s227 + $0x28] sm:$0xff] %vm1074, %v1021
      %1081 = vst.msk [vmem:[%s227 + $0x30] sm:$0xff] %vm1074, %v1023
      %1082 = vst.msk [vmem:[%s227 + $0x38] sm:$0xff] %vm1074, %v1025
      %1083 = vst.msk [vmem:[%s227 + $0x40] sm:$0xff] %vm1074, %v1027
      %1084 = vst.msk [vmem:[%s227 + $0x48] sm:$0xff] %vm1074, %v1029
      %1085 = vst.msk [vmem:[%s227 + $0x50] sm:$0xff] %vm1074, %v1031
      %1086 = vst.msk [vmem:[%s227 + $0x58] sm:$0xff] %vm1074, %v1033
      %1087 = vst.msk [vmem:[%s227 + $0x60] sm:$0xff] %vm1074, %v1035
      %1088 = vst.msk [vmem:[%s227 + $0x68] sm:$0xff] %vm1074, %v1037
      %1089 = vst.msk [vmem:[%s227 + $0x70] sm:$0xff] %vm1074, %v1039
      %1090 = vst.msk [vmem:[%s227 + $0x78] sm:$0xff] %vm1074, %v1041
      %1091 = vst.msk [vmem:[%s227 + $0x80] sm:$0xff] %vm1074, %v1043
      %1092 = vst.msk [vmem:[%s227 + $0x88] sm:$0xff] %vm1074, %v1045
      %1093 = vst.msk [vmem:[%s227 + $0x90] sm:$0xff] %vm1074, %v1047
      %1094 = vst.msk [vmem:[%s227 + $0x98] sm:$0xff] %vm1074, %v1049
      %1095 = vst.msk [vmem:[%s227 + $0xa0] sm:$0xff] %vm1074, %v1051
      %1096 = vst.msk [vmem:[%s227 + $0xa8] sm:$0xff] %vm1074, %v1053
      %1097 = vst.msk [vmem:[%s227 + $0xb0] sm:$0xff] %vm1074, %v1055
      %1098 = vst.msk [vmem:[%s227 + $0xb8] sm:$0xff] %vm1074, %v1057
      %1099 = vst.msk [vmem:[%s227 + $0xc0] sm:$0xff] %vm1074, %v1059
      %1100 = vst.msk [vmem:[%s227 + $0xc8] sm:$0xff] %vm1074, %v1061
      %1101 = vst.msk [vmem:[%s227 + $0xd0] sm:$0xff] %vm1074, %v1063
      %1102 = vst.msk [vmem:[%s227 + $0xd8] sm:$0xff] %vm1074, %v1065
      %1103 = vst.msk [vmem:[%s227 + $0xe0] sm:$0xff] %vm1074, %v1067
      %1104 = vst.msk [vmem:[%s227 + $0xe8] sm:$0xff] %vm1074, %v1069
      %1105 = vst.msk [vmem:[%s227 + $0xf0] sm:$0xff] %vm1074, %v1071
      %1106 = vst.msk [vmem:[%s227 + $0xf8] sm:$0xff] %vm1074, %v1073
      %s1107 = smul.u32 32, %s17
      %p1108 = scmp.lt.s32.totalorder %s1107, 63
      %s1109 = scalar_select %p1108, %s1107, 63
      %s1110 = smul.addr %s1109, 8
      %s1111 = scalar_lea.vmem %s5, %s1110
      // Predicated region
      $region41: #{discriminator_forward.1} parent=39 // pred_check
        %p1112 = pneg %p145
      $region42: #{discriminator_forward.1} parent=39 // pred_check_branch
        %1114 = sbr.rel (%p1112) target = $region44
      $region43: #{discriminator_forward.1} parent=39 // pred_region
        %s1115 = smul.u32 32, %s17
      $region44: #{discriminator_forward.1} parent=39 // pred_fallthru
        _
    $region40: #{discriminator_forward.1} parent=5 // pred_fallthru
      _
    %p1116 = scmp.le.s32.totalorder 2, %s12
    // Predicated region
    $region45: #{discriminator_forward.1} parent=5 // pred_check
      %p1117 = pneg %p1116
    $region46: #{discriminator_forward.1} parent=5 // pred_check_branch
      %1119 = sbr.rel (%p1117) target = $region48
    $region47: #{discriminator_forward.1} parent=5 // pred_region
      %s1120 = ssub.s32 %s12, 2
      // Predicated region
      $region49: #{discriminator_forward.1} parent=47 // pred_check
        %p1121 = pneg %p151
      $region50: #{discriminator_forward.1} parent=47 // pred_check_branch
        %1123 = sbr.rel (%p1121) target = $region52
      $region51: #{discriminator_forward.1} parent=47 // pred_region
        %s1124 = smul.u32 32, %s18
        %p1125 = scmp.lt.s32.totalorder %s1124, 63
        %s1126 = scalar_select %p1125, %s1124, 63
        %s1127 = smul.addr %s1126, 8
        %s1128 = scalar_lea.vmem %s5, %s1127
      $region52: #{discriminator_forward.1} parent=47 // pred_fallthru
        _
    $region48: #{discriminator_forward.1} parent=5 // pred_fallthru
      _
  $region6: #{discriminator_forward.1} parent=0 // loop_footer
    %s16 = sadd.s32 1, %s12
  $region7: #{discriminator_forward.1} parent=0 // loop_footer_branch
    %11 = sbr.rel target = $region3
  $region8: #{discriminator_forward.1} parent=0 // loop_exit
    _

</llo_original>
